<compile_context>
chip_gen: v5e
topology: v5e:2x2
jax: 0.10.0
libtpu: 0.0.40
codegen_flags: <defaults>
</compile_context>

<pallas_src>
import math

import jax
import jax.numpy as jnp
from jax.experimental import pallas as pl
from jax.experimental.pallas import tpu as pltpu


def _reward_kernel(bias_ref, wa_ref, ws_ref, wn_ref, a_ref, s_ref, n_ref, o_ref):
    # a_ref : (RT, A)   rows on sublanes, features on lanes (natural layout)
    # s_ref : (RT, S)
    # n_ref : (RT, S)
    # w*    : (1, F_i)  f32 weight rows, broadcast down the sublane (row) axis
    # bias  : (1,) SMEM scalar -- weight of the implicit `ones` feature
    #
    # In-kernel cast is a no-op for f32 inputs; for bf16 inputs it widens on
    # the VPU (kept for accumulation precision).
    a = a_ref[...].astype(jnp.float32)
    s = s_ref[...].astype(jnp.float32)
    n = n_ref[...].astype(jnp.float32)

    wa = wa_ref[...]                          # (1, A)
    ws = ws_ref[...]                          # (1, S)
    wn = wn_ref[...]                          # (1, S)

    # state / next_state have the same width: fuse their weighted sum before
    # the cross-lane reduce (one XLU reduce instead of two).
    acc = jnp.sum(s * ws + n * wn, axis=-1, keepdims=True)      # (RT, 1)
    acc = acc + jnp.sum(a * wa, axis=-1, keepdims=True)         # (RT, 1)
    o_ref[...] = (acc + bias_ref[0]).astype(o_ref.dtype)


def _choose_row_tile(n_rows):
    # Rows sit on the sublane axis, so the only hard constraint is a multiple
    # of 8.  Target 4096 rows/step: per-step HBM time (~0.3-0.6 us for ~28 f32
    # features/row across v5e/v6e/v7x) is then comparable to the ~0.35 us
    # fixed per-step pipeline overhead, while worst-case (lane-padded,
    # double-buffered) VMEM stays ~20 MiB -- under the 32 MiB scoped limit
    # requested below on every generation.  Do NOT shrink the tile just to
    # get extra (serial) grid steps.  Callers with very large N can pass a
    # bigger row_tile (footprint is roughly 5 KiB per row).
    target = 4096
    if n_rows >= target:
        return target
    return max(8, pl.cdiv(n_rows, 8) * 8)     # single step, minimal padding


def reward_model_forward(action, state, next_state, weight, *,
                         row_tile=None, force_kernel=False,
                         small_n_threshold=1024):
    """Pallas implementation of RewardModel.forward (no cost/dyn_spec branch)."""
    action_size = action.shape[-1]
    state_size = state.shape[-1]
    feature_size = 1 + action_size + 2 * state_size
    assert weight.shape == (feature_size, 1)

    lead_shape = state.shape[:-1]
    n_rows = math.prod(lead_shape) if lead_shape else 1

    # --- weight plumbing (29 floats, negligible) ----------------------------
    w = weight.astype(jnp.float32)
    bias = w[0, :]                                             # (1,) -> SMEM
    wa = w[1:1 + action_size, 0].reshape(1, action_size)       # (1, A)
    ws = w[1 + action_size:1 + action_size + state_size, 0].reshape(1, state_size)
    wn = w[1 + action_size + state_size:, 0].reshape(1, state_size)

    # Pure metadata reshapes of row-major arrays (no HBM pass).
    a2 = action.reshape(n_rows, action_size)
    s2 = state.reshape(n_rows, state_size)
    ns2 = next_state.reshape(n_rows, state_size)

    # Small-N fast path: pallas_call fixed overhead dwarfs the work.
    if not force_kernel and n_rows < small_n_threshold:
        r = (a2.astype(jnp.float32) @ wa.T
             + s2.astype(jnp.float32) @ ws.T
             + ns2.astype(jnp.float32) @ wn.T
             + bias)
        return r.reshape(*lead_shape, 1)

    if row_tile is None:
        row_tile = _choose_row_tile(n_rows)
    assert row_tile % 8 == 0

    grid = (pl.cdiv(n_rows, row_tile),)

    # The tiny (1, F_i) weight blocks have a constant index_map, so the
    # pipeline does not need to re-fetch them between steps (and even if it
    # did, they are < 120 bytes).
    out = pl.pallas_call(
        _reward_kernel,
        out_shape=jax.ShapeDtypeStruct((n_rows, 1), jnp.float32),
        grid_spec=pltpu.PrefetchScalarGridSpec(
            num_scalar_prefetch=0,
            grid=grid,
            in_specs=[
                pl.BlockSpec(memory_space=pltpu.MemorySpace.SMEM),        # bias (1,)
                pl.BlockSpec((1, action_size), lambda i: (0, 0)),         # w_action
                pl.BlockSpec((1, state_size), lambda i: (0, 0)),          # w_state
                pl.BlockSpec((1, state_size), lambda i: (0, 0)),          # w_next
                pl.BlockSpec((row_tile, action_size), lambda i: (i, 0)),  # action
                pl.BlockSpec((row_tile, state_size), lambda i: (i, 0)),   # state
                pl.BlockSpec((row_tile, state_size), lambda i: (i, 0)),   # next_state
            ],
            out_specs=pl.BlockSpec((row_tile, 1), lambda i: (i, 0)),
        ),
        compiler_params=pltpu.CompilerParams(
            dimension_semantics=("parallel",),
            # 32 MiB == the v6e/v7x scoped default; raises v5e's 16 MiB so the
            # larger row tiles fit everywhere.
            vmem_limit_bytes=32 * 1024 * 1024,
        ),
    )(bias, wa, ws, wn, a2, s2, ns2)

    return out.reshape(*lead_shape, 1)


def reward_model_forward_ref(action, state, next_state, weight):
    ones = jnp.ones((*action.shape[:-1], 1), jnp.float32)
    feats = jnp.concatenate(
        [ones, action.astype(jnp.float32), state.astype(jnp.float32),
         next_state.astype(jnp.float32)], axis=-1)
    r = feats.reshape(-1, feats.shape[-1]) @ weight.astype(jnp.float32)
    return r.reshape(*state.shape[:-1], 1)


if __name__ == "__main__":
    action_size, state_size = 4, 12
    feature_size = 1 + action_size + 2 * state_size   # 29

    key = jax.random.PRNGKey(0)
    k_a, k_s, k_n, k_w, k_a2, k_s2, k_n2 = jax.random.split(key, 7)

    # NOTE: the module's __init__ sets weight to zeros (it is fit later); use
    # a deterministic random weight so the kernel output is non-trivial.
    weight = jax.random.normal(k_w, (feature_size, 1), jnp.float32) * 0.1

    # Case 1: small shapes consistent with the module's forward (N=16 rows).
    batch, seq = 2, 8
    action = jax.random.normal(k_a, (batch, seq, action_size), jnp.float32)
    state = jax.random.normal(k_s, (batch, seq, state_size), jnp.float32)
    next_state = jax.random.normal(k_n, (batch, seq, state_size), jnp.float32)

    out = reward_model_forward(action, state, next_state, weight,
                               force_kernel=True)
    out = jax.block_until_ready(out)
    ref = reward_model_forward_ref(action, state, next_state, weight)
    assert out.shape == (batch, seq, 1)
    assert jnp.allclose(out, ref, atol=1e-5, rtol=1e-5)

    # Case 2: row count not a multiple of the tile -> multi-step grid with a
    # ragged (masked) final block, no HBM padding pass.
    batch2, seq2 = 3, 50                               # N = 150, row_tile=64 -> 3 steps
    action2 = jax.random.normal(k_a2, (batch2, seq2, action_size), jnp.float32)
    state2 = jax.random.normal(k_s2, (batch2, seq2, state_size), jnp.float32)
    next_state2 = jax.random.normal(k_n2, (batch2, seq2, state_size), jnp.float32)

    out2 = reward_model_forward(action2, state2, next_state2, weight,
                                row_tile=64, force_kernel=True)
    out2 = jax.block_until_ready(out2)
    ref2 = reward_model_forward_ref(action2, state2, next_state2, weight)
    assert out2.shape == (batch2, seq2, 1)
    assert jnp.allclose(out2, ref2, atol=1e-5, rtol=1e-5)

    # Case 3: default small-N fast path (no pallas_call) matches too.
    out3 = reward_model_forward(action, state, next_state, weight)
    out3 = jax.block_until_ready(out3)
    assert jnp.allclose(out3, ref, atol=1e-5, rtol=1e-5)

    print("KERNEL_OK")
</pallas_src>

<mosaic_0001>
module attributes {stable_mosaic.version = 11 : i64} {
  func.func @_reward_kernel(%arg0: i32, %arg1: memref<1xf32, #tpu.memory_space<smem>>, %arg2: memref<1x4xf32, #tpu.memory_space<vmem>>, %arg3: memref<1x12xf32, #tpu.memory_space<vmem>>, %arg4: memref<1x12xf32, #tpu.memory_space<vmem>>, %arg5: memref<16x4xf32, #tpu.memory_space<vmem>>, %arg6: memref<16x12xf32, #tpu.memory_space<vmem>>, %arg7: memref<16x12xf32, #tpu.memory_space<vmem>>, %arg8: memref<16x1xf32, #tpu.memory_space<vmem>>) attributes {dimension_semantics = [#tpu.dimension_semantics<parallel>], iteration_bounds = array<i64: 1>, scalar_prefetch = 0 : i64, scratch_operands = 0 : i64, tpu.core_type = #tpu.core_type<tc>, window_params = [{transform_indices = @transform_0, window_bounds = array<i64: 1>}, {pipeline_mode = #tpu.pipeline_mode<synchronous>, transform_indices = @transform_1, window_bounds = array<i64: 1, 4>}, {pipeline_mode = #tpu.pipeline_mode<synchronous>, transform_indices = @transform_2, window_bounds = array<i64: 1, 12>}, {pipeline_mode = #tpu.pipeline_mode<synchronous>, transform_indices = @transform_3, window_bounds = array<i64: 1, 12>}, {transform_indices = @transform_4, window_bounds = array<i64: 16, 4>}, {transform_indices = @transform_5, window_bounds = array<i64: 16, 12>}, {transform_indices = @transform_6, window_bounds = array<i64: 16, 12>}, {transform_indices = @transform_7, window_bounds = array<i64: 16, 1>}]} {
    %c0 = arith.constant 0 : index
    %c0_0 = arith.constant 0 : index
    %0 = vector.load %arg5[%c0, %c0_0] : memref<16x4xf32, #tpu.memory_space<vmem>>, vector<16x4xf32>
    %c0_1 = arith.constant 0 : index
    %c0_2 = arith.constant 0 : index
    %1 = vector.load %arg6[%c0_1, %c0_2] : memref<16x12xf32, #tpu.memory_space<vmem>>, vector<16x12xf32>
    %c0_3 = arith.constant 0 : index
    %c0_4 = arith.constant 0 : index
    %2 = vector.load %arg7[%c0_3, %c0_4] : memref<16x12xf32, #tpu.memory_space<vmem>>, vector<16x12xf32>
    %c0_5 = arith.constant 0 : index
    %c0_6 = arith.constant 0 : index
    %3 = vector.load %arg2[%c0_5, %c0_6] : memref<1x4xf32, #tpu.memory_space<vmem>>, vector<1x4xf32>
    %c0_7 = arith.constant 0 : index
    %c0_8 = arith.constant 0 : index
    %4 = vector.load %arg3[%c0_7, %c0_8] : memref<1x12xf32, #tpu.memory_space<vmem>>, vector<1x12xf32>
    %c0_9 = arith.constant 0 : index
    %c0_10 = arith.constant 0 : index
    %5 = vector.load %arg4[%c0_9, %c0_10] : memref<1x12xf32, #tpu.memory_space<vmem>>, vector<1x12xf32>
    %6 = vector.broadcast %4 : vector<1x12xf32> to vector<16x12xf32>
    %7 = arith.mulf %1, %6 : vector<16x12xf32>
    %8 = vector.broadcast %5 : vector<1x12xf32> to vector<16x12xf32>
    %9 = arith.mulf %2, %8 : vector<16x12xf32>
    %10 = arith.addf %7, %9 : vector<16x12xf32>
    %cst = arith.constant dense<0.000000e+00> : vector<16xf32>
    %11 = vector.multi_reduction <add>, %10, %cst [1] : vector<16x12xf32> to vector<16xf32>
    %12 = vector.shape_cast %11 : vector<16xf32> to vector<16x1xf32>
    %13 = vector.broadcast %3 : vector<1x4xf32> to vector<16x4xf32>
    %14 = arith.mulf %0, %13 : vector<16x4xf32>
    %cst_11 = arith.constant dense<0.000000e+00> : vector<16xf32>
    %15 = vector.multi_reduction <add>, %14, %cst_11 [1] : vector<16x4xf32> to vector<16xf32>
    %16 = vector.shape_cast %15 : vector<16xf32> to vector<16x1xf32>
    %17 = arith.addf %12, %16 : vector<16x1xf32>
    %c0_12 = arith.constant 0 : index
    %18 = memref.load %arg1[%c0_12] : memref<1xf32, #tpu.memory_space<smem>>
    %19 = vector.broadcast %18 : f32 to vector<16x1xf32>
    %20 = arith.addf %17, %19 : vector<16x1xf32>
    %c0_13 = arith.constant 0 : index
    %c0_14 = arith.constant 0 : index
    %21 = vector.load %arg8[%c0_13, %c0_14] : memref<16x1xf32, #tpu.memory_space<vmem>>, vector<16x1xf32>
    tpu.vector_store %arg8[%c0_13, %c0_14], %20 {strides = array<i32>} : memref<16x1xf32, #tpu.memory_space<vmem>>, vector<16x1xf32>,
    return
  }
  func.func @transform_0(%arg0: i32) -> i32 {
    %c0_i32 = arith.constant 0 : i32
    %c0_i32_0 = arith.constant 0 : i32
    return %c0_i32 : i32
  }
  func.func @transform_1(%arg0: i32) -> (i32, i32) {
    %c0_i32 = arith.constant 0 : i32
    %c0_i32_0 = arith.constant 0 : i32
    %c0_i32_1 = arith.constant 0 : i32
    return %c0_i32, %c0_i32_0 : i32, i32
  }
  func.func @transform_2(%arg0: i32) -> (i32, i32) {
    %c0_i32 = arith.constant 0 : i32
    %c0_i32_0 = arith.constant 0 : i32
    %c0_i32_1 = arith.constant 0 : i32
    return %c0_i32, %c0_i32_0 : i32, i32
  }
  func.func @transform_3(%arg0: i32) -> (i32, i32) {
    %c0_i32 = arith.constant 0 : i32
    %c0_i32_0 = arith.constant 0 : i32
    %c0_i32_1 = arith.constant 0 : i32
    return %c0_i32, %c0_i32_0 : i32, i32
  }
  func.func @transform_4(%arg0: i32) -> (i32, i32) {
    %c0_i32 = arith.constant 0 : i32
    %c0_i32_0 = arith.constant 0 : i32
    return %arg0, %c0_i32 : i32, i32
  }
  func.func @transform_5(%arg0: i32) -> (i32, i32) {
    %c0_i32 = arith.constant 0 : i32
    %c0_i32_0 = arith.constant 0 : i32
    return %arg0, %c0_i32 : i32, i32
  }
  func.func @transform_6(%arg0: i32) -> (i32, i32) {
    %c0_i32 = arith.constant 0 : i32
    %c0_i32_0 = arith.constant 0 : i32
    return %arg0, %c0_i32 : i32, i32
  }
  func.func @transform_7(%arg0: i32) -> (i32, i32) {
    %c0_i32 = arith.constant 0 : i32
    %c0_i32_0 = arith.constant 0 : i32
    return %arg0, %c0_i32 : i32, i32
  }
}

</mosaic_0001>

<llo_original>
// kernel: tpu_custom_call.1
$region0: #{tpu_custom_call.1}
  #allocation0 [shape = 'u32[]', space=smem, size = 0x4, offset = 0x4, fixed_abs, tag = 'smem constant byte address 0x4 - core index']
  #allocation1 [shape = 'u32[72,128]{1,0:T(1,128)}', space=vmem, size = 0x9000, scoped, tag = 'internal scratch']
  #allocation2 [shape = 'f32[1]{0:T(128)S(6)}', space=smem, size = 0x200, scoped, tag = 'scoped memory for tpu_custom_call.1']
  %s0 = inlined_call_operand.<no memory space> [shape: f32[1], index: 0, kind: input, shape index: {}]
  %s1 = inlined_call_operand.vmem [shape: f32[1,4], index: 1, kind: input, shape index: {}]
  %s2 = inlined_call_operand.vmem [shape: f32[1,12], index: 2, kind: input, shape index: {}]
  %s3 = inlined_call_operand.vmem [shape: f32[1,12], index: 3, kind: input, shape index: {}]
  %s4 = inlined_call_operand.vmem [shape: f32[16,4], index: 4, kind: input, shape index: {}]
  %s5 = inlined_call_operand.vmem [shape: f32[16,12], index: 5, kind: input, shape index: {}]
  %s6 = inlined_call_operand.hbm [shape: f32[16,12], index: 6, kind: input, shape index: {}]
  %s7 = inlined_call_operand.vmem [shape: f32[16,1], index: 7, kind: output, shape index: {}]
  %s8 = sld [smem:[#allocation0]]
  $region42: #{tpu_custom_call.1} parent=0
    _
  %s10 = ssub.s32 1, %s8
  %s11 = scalar_select 0, %s10, %s8
  %12 = sst [smem:[#allocation2]] %s0
  $region1: #{tpu_custom_call.1} parent=0
    #allocation3 [shape = 'u8[8192]{0}', space=vmem, size = 0x2000, scoped, tag = 'input window, operand 6, single buffered']
    #allocation4 [shape = 's32[1]{0}', space=sflag, size = 0x4, scoped, tag = 'scoped memory for tpu_custom_call.1']
    %13 = vsyncpa [#allocation4], 0
    // Predicated region
    $region2: #{tpu_custom_call.1} parent=1 // pred_check
      _
    $region3: #{tpu_custom_call.1} parent=1 // pred_check_branch
      %15 = sbr.rel (0) target = $region5
    $region4: #{tpu_custom_call.1} parent=1 // pred_region
      _
    $region5: #{tpu_custom_call.1} parent=1 // pred_fallthru
      _
    // Predicated region
    $region6: #{tpu_custom_call.1} parent=1 // pred_check
      _
    $region7: #{tpu_custom_call.1} parent=1 // pred_check_branch
      %17 = sbr.rel (0) target = $region9
    $region8: #{tpu_custom_call.1} parent=1 // pred_region
      _
    $region9: #{tpu_custom_call.1} parent=1 // pred_fallthru
      _
    // Predicated region
    $region10: #{tpu_custom_call.1} parent=1 // pred_check
      _
    $region11: #{tpu_custom_call.1} parent=1 // pred_check_branch
      %19 = sbr.rel (0) target = $region13
    $region12: #{tpu_custom_call.1} parent=1 // pred_region
      _
    $region13: #{tpu_custom_call.1} parent=1 // pred_fallthru
      _
    // Predicated region
    $region14: #{tpu_custom_call.1} parent=1 // pred_check
      _
    $region15: #{tpu_custom_call.1} parent=1 // pred_check_branch
      %21 = sbr.rel (0) target = $region17
    $region16: #{tpu_custom_call.1} parent=1 // pred_region
      _
    $region17: #{tpu_custom_call.1} parent=1 // pred_fallthru
      _
    // Predicated region
    $region18: #{tpu_custom_call.1} parent=1 // pred_check
      _
    $region19: #{tpu_custom_call.1} parent=1 // pred_check_branch
      %23 = sbr.rel (0) target = $region21
    $region20: #{tpu_custom_call.1} parent=1 // pred_region
      _
    $region21: #{tpu_custom_call.1} parent=1 // pred_fallthru
      _
    // Predicated region
    $region22: #{tpu_custom_call.1} parent=1 // pred_check
      _
    $region23: #{tpu_custom_call.1} parent=1 // pred_check_branch
      %25 = sbr.rel (0) target = $region25
    $region24: #{tpu_custom_call.1} parent=1 // pred_region
      _
    $region25: #{tpu_custom_call.1} parent=1 // pred_fallthru
      _
    // Predicated region
    $region26: #{tpu_custom_call.1} parent=1 // pred_check
      _
    $region27: #{tpu_custom_call.1} parent=1 // pred_check_branch
      %27 = sbr.rel (0) target = $region29
    $region28: #{tpu_custom_call.1} parent=1 // pred_region
      %29 = vsyncadd [#allocation4], 0
      %s30 = sshll.u32 %s6, 4
      %s31 = int_to_ptr.hbm [resolvable:$true] %s30
      %s32 = sshll.u32 [#allocation3], 4
      %s33 = int_to_ptr.vmem [resolvable:$true] %s32
      %38 = dma.hbm_to_vmem [thread:$0]  %s31, 256, %s33, [#allocation4], 128, 128, 8
    $region29: #{tpu_custom_call.1} parent=1 // pred_fallthru
      _
    // Predicated region
    $region30: #{tpu_custom_call.1} parent=1 // pred_check
      _
    $region31: #{tpu_custom_call.1} parent=1 // pred_check_branch
      %40 = sbr.rel (0) target = $region33
    $region32: #{tpu_custom_call.1} parent=1 // pred_region
      %42 = dma.done [#allocation4], 256
    $region33: #{tpu_custom_call.1} parent=1 // pred_fallthru
      _
    %v43 = vld [vmem:[%s4] sm:$0xff]
    %v44 = vld [vmem:[%s4 + $0x8] sm:$0xff]
    %v45 = vld [vmem:[%s5] sm:$0xff]
    %v46 = vld [vmem:[%s5 + $0x8] sm:$0xff]
    %v47 = vld [vmem:[#allocation3] sm:$0xff]
    %v48 = vld [vmem:[#allocation3 + $0x8] sm:$0xff]
    %v49 = vld [vmem:[%s1] sm:$0x1]
    %v50 = vld [vmem:[%s2] sm:$0x1]
    %v51 = vld [vmem:[%s3] sm:$0x1]
    %v53 = vperm.slane %v50, 0
    %v55 = vmul.f32 %v45, %v53
    %v56 = vmul.f32 %v46, %v53
    %v58 = vperm.slane %v51, 0
    %v60 = vmul.f32 %v47, %v58
    %v61 = vmul.f32 %v48, %v58
    %v62 = vadd.f32 %v55, %v60
    %v63 = vadd.f32 %v56, %v61
    %vm64 = vcmask 97280
    %v65 = vsel %vm64, %v62, 0.0
    %66 = vadd.xlane.f32.xlu0 %v65
    %v67 = vpop.xlane.xlu0 %66
    %v68 = vsel %vm64, %v63, 0.0
    %69 = vadd.xlane.f32.xlu0 %v68
    %v70 = vpop.xlane.xlu0 %69
    %v72 = vperm.slane %v49, 0
    %v74 = vmul.f32 %v43, %v72
    %v75 = vmul.f32 %v44, %v72
    %vm76 = vcmask 31744
    %v77 = vsel %vm76, %v74, 0.0
    %78 = vadd.xlane.f32.xlu0 %v77
    %v79 = vpop.xlane.xlu0 %78
    %v80 = vsel %vm76, %v75, 0.0
    %81 = vadd.xlane.f32.xlu0 %v80
    %v82 = vpop.xlane.xlu0 %81
    %v83 = vadd.f32 %v67, %v79
    %v84 = vadd.f32 %v70, %v82
    %s85 = sld [smem:[#allocation2]]
    %v86 = vstv %s85
    %v87 = vadd.f32 %v83, %v86
    %v88 = vadd.f32 %v84, %v86
    %vm89 = vcmask 7168
    %90 = vst.msk [vmem:[%s7] sm:$0xff] %vm89, %v87
    %91 = vst.msk [vmem:[%s7 + $0x8] sm:$0xff] %vm89, %v88
    // Predicated region
    $region34: #{tpu_custom_call.1} parent=1 // pred_check
      _
    $region35: #{tpu_custom_call.1} parent=1 // pred_check_branch
      %93 = sbr.rel (0) target = $region37
    $region36: #{tpu_custom_call.1} parent=1 // pred_region
      _
    $region37: #{tpu_custom_call.1} parent=1 // pred_fallthru
      _
    // Predicated region
    $region38: #{tpu_custom_call.1} parent=1 // pred_check
      _
    $region39: #{tpu_custom_call.1} parent=1 // pred_check_branch
      %95 = sbr.rel (0) target = $region41
    $region40: #{tpu_custom_call.1} parent=1 // pred_region
      _
    $region41: #{tpu_custom_call.1} parent=1 // pred_fallthru
      _
    %96 = vsyncpa [#allocation4], 1

</llo_original>
